<compile_context>
chip_gen: v7x
topology: tpu7x:2x2x1
jax: 0.10.0
libtpu: 0.0.40
codegen_flags: <defaults>
</compile_context>

<pallas_src>
import functools

import numpy as np
import jax
import jax.numpy as jnp
from jax.experimental import pallas as pl
from jax.experimental.pallas import tpu as pltpu


def _round_up(x, m):
    return (x + m - 1) // m * m


def _vmem_capacity_bytes():
    try:
        return int(pltpu.get_tpu_info().vmem_capacity_bytes)
    except Exception:
        return 64 * 1024 * 1024          # conservative (v7x per-core VMEM)


def _pick_row_tile(N, L, D, H_pad, H_out, capacity):
    """Largest row tile whose per-step working set fits the VMEM budget."""
    nj = _round_up(N, 8)
    ln = L * nj
    budget = capacity - 16 * 1024 * 1024          # headroom for Mosaic internals
    fixed = (2 * nj * D * 4                       # nodes (double-buffered)
             + 2 * D * L * H_out * 4              # W2 (double-buffered, see TODO)
             + 2 * 8 * L * H_out * 4              # b2 (sublane-padded)
             + 2 * ln * H_out * 2                 # Z hi/lo bf16 scratch
             + 8 * 1024 * 1024)                   # Z-build temps + misc slack
    per_row = 2 * ln * 2 + 2 * H_pad * 4 + 4 * H_out * 4

    def fits(t):
        return fixed + t * per_row <= budget

    if N <= 256 and fits(_round_up(N, 8)):
        return _round_up(N, 8)                    # single row tile covers all rows
    candidates = [t for t in (512, 384, 256, 192, 128, 96, 64, 48, 32, 16) if fits(t)]
    if not candidates:
        return 16
    for t in candidates:                          # prefer low row-padding waste
        n_pad = _round_up(N, t)
        if n_pad - N <= max(t // 8, n_pad // 8):
            return t
    return candidates[-1]


def prepare_graph(graph):
    """(B, N, N, L) 0/1 adjacency -> (B, N, L*Nj) bf16, label-major lane-dense.

    Hoist this out of the layer when the same graph feeds several GCN layers.
    """
    # TODO(synk): ideally the producer emits this bf16 layout directly (or a
    # j-major kernel variant is used), removing this extra HBM pass entirely.
    B, N, _, L = graph.shape
    nj = _round_up(N, 8)
    g = graph
    if nj != N:
        g = jnp.pad(g, ((0, 0), (0, 0), (0, nj - N), (0, 0)))
    g = jnp.transpose(g, (0, 1, 3, 2)).astype(jnp.bfloat16)      # (B, N, L, Nj)
    return g.reshape(B, N, L * nj)


def _syngcn_kernel(graph_ref, nodes_ref, w2_ref, b2_ref, out_ref,
                   z_hi_ref, z_lo_ref, *, num_labels, h_true, h_pad, h_out,
                   label_chunk):
    nj = nodes_ref.shape[1]

    # ---- Build the fused RHS (Z) once per batch: first row tile only. ------
    @pl.when(pl.program_id(1) == 0)
    def _build_rhs():
        nodes = nodes_ref[0]                                      # (Nj, D) f32
        for c0 in range(0, num_labels, label_chunk):
            nl = min(label_chunk, num_labels - c0)
            cols = nl * h_out
            # One wide matmul per label chunk (contraction = D, >=128 output
            # lanes per label); bias and the ones column are packed into b2.
            zz = jnp.dot(nodes, w2_ref[:, pl.ds(c0 * h_out, cols)],
                         preferred_element_type=jnp.float32)
            zz = zz + b2_ref[:, pl.ds(c0 * h_out, cols)]          # (Nj, cols)
            for dl in range(nl):
                blk = zz[:, dl * h_out:(dl + 1) * h_out]          # (Nj, H_out) f32
                hi = blk.astype(jnp.bfloat16)
                z_hi_ref[pl.ds((c0 + dl) * nj, nj), :] = hi
                z_lo_ref[pl.ds((c0 + dl) * nj, nj), :] = (
                    blk - hi.astype(jnp.float32)).astype(jnp.bfloat16)

    # ---- Main contraction: bf16 graph tile x bf16 Z (hi/lo split), f32 acc. -
    g = graph_ref[0]                                              # (rows, L*Nj) bf16
    hb = jnp.dot(g, z_hi_ref[...], preferred_element_type=jnp.float32)
    hb = hb + jnp.dot(g, z_lo_ref[...], preferred_element_type=jnp.float32)

    # Normalizer comes out of the same matmul (ones column at lane h_true).
    norm = hb[:, h_true:h_true + 1] + 1e-10                       # (rows, 1)
    inv = pl.reciprocal(norm, approx=False)                       # column recip, not a wide divide
    out_ref[0] = jnp.maximum(hb[:, :h_pad] * inv, 0.0)


def syntactic_gcn(graph, nodes, W, b=None, *, row_tile=None):
    """graph: (B,N,N,L) 0/1 adjacency-per-label (or the output of prepare_graph),
    nodes: (B,N,D) f32, W: (L,D,H) f32, b: (L,H) f32 or None -> (B,N,H) f32."""
    nodes = nodes.astype(jnp.float32)
    W = W.astype(jnp.float32)
    B, N, D = nodes.shape
    L, _, H = W.shape
    nj = _round_up(N, 8)

    if graph.ndim == 4:
        graph = prepare_graph(graph)
    assert graph.shape == (B, N, L * nj), "prepared graph shape mismatch"

    # Lane-dense output: pad H to a multiple of 128; the normalizer ones column
    # lives at lane H (free when H is not already 128-aligned).
    H_pad = _round_up(H, 128)
    H_out = H_pad if H_pad > H else H_pad + 128

    capacity = _vmem_capacity_bytes()
    if row_tile is None:
        row_tile = _pick_row_tile(N, L, D, H_pad, H_out, capacity)
    n_i = _round_up(N, row_tile)

    if n_i != N:
        graph = jnp.pad(graph, ((0, 0), (0, n_i - N), (0, 0)))
    if nj != N:
        nodes = jnp.pad(nodes, ((0, 0), (0, nj - N), (0, 0)))

    # Pack W/b into one (D, L*H_out) right-hand side with the bias and the
    # normalizer ones column folded in (tiny host/XLA-side tensors).
    W2 = jnp.zeros((D, L, H_out), jnp.float32)
    W2 = W2.at[:, :, :H].set(jnp.transpose(W, (1, 0, 2)))
    W2 = W2.reshape(D, L * H_out)
    b_blk = jnp.zeros((L, H_out), jnp.float32)
    if b is not None:
        b_blk = b_blk.at[:, :H].set(b.astype(jnp.float32))
    b_blk = b_blk.at[:, H].set(1.0)                     # ones column -> normalizer
    b2 = b_blk.reshape(1, L * H_out)

    # Z build runs in label chunks wide enough to keep the MXU busy while
    # bounding the f32 temp.
    label_chunk = max(1, min(L, 2048 // H_out))
    grid = (B, n_i // row_tile)

    kernel = functools.partial(
        _syngcn_kernel, num_labels=L, h_true=H, h_pad=H_pad, h_out=H_out,
        label_chunk=label_chunk)

    # TODO(synk): mark the grid-invariant W2/b2/nodes specs with
    # pipeline_mode=pl.Buffered(1) (or DMA them once via pl.ANY) to reclaim
    # their double-buffer VMEM once single-buffered BlockSpecs are verified on
    # the target jax version.
    # TODO(synk): for B == 1 on v7x (2 TensorCores), split the row axis across
    # cores (grid (B, 2, rows/2), core axis parallel, Z rebuilt per core half)
    # so a single-batch call does not idle one core.
    out = pl.pallas_call(
        kernel,
        out_shape=jax.ShapeDtypeStruct((B, n_i, H_pad), jnp.float32),
        grid_spec=pltpu.PrefetchScalarGridSpec(
            num_scalar_prefetch=0,
            grid=grid,
            in_specs=[
                pl.BlockSpec((1, row_tile, L * nj), lambda bi, ri: (bi, ri, 0)),
                pl.BlockSpec((1, nj, D), lambda bi, ri: (bi, 0, 0)),
                pl.BlockSpec((D, L * H_out), lambda bi, ri: (0, 0)),
                pl.BlockSpec((1, L * H_out), lambda bi, ri: (0, 0)),
            ],
            out_specs=pl.BlockSpec((1, row_tile, H_pad), lambda bi, ri: (bi, ri, 0)),
            scratch_shapes=[
                pltpu.VMEM((L * nj, H_out), jnp.bfloat16),    # Z (hi part)
                pltpu.VMEM((L * nj, H_out), jnp.bfloat16),    # Z (lo residual)
            ],
        ),
        compiler_params=pltpu.CompilerParams(
            # Batch axis megacore-parallel; row axis must stay "arbitrary" so
            # the per-batch Z scratch built at row tile 0 is valid afterwards.
            dimension_semantics=("parallel", "arbitrary"),
            vmem_limit_bytes=int(max(capacity - 16 * 1024 * 1024,
                                     32 * 1024 * 1024)),
        ),
    )(graph, nodes, W2, b2)

    return out[:, :N, :H]


def _reference(graph, nodes, W, b):
    """Pure-JAX reference mirroring the PyTorch forward (all f32)."""
    g = graph.astype(jnp.float32)                            # (B, N, N, L)
    x = jnp.einsum("bijl,bjd->bild", g, nodes)               # (B, N, L, D)
    h = jnp.einsum("bild,ldh->bih", x, W)                    # (B, N, H)
    bias = jnp.einsum("bijl,lh->bih", g, b)                  # (B, N, H)
    norm = jnp.sum(g, axis=(2, 3))[..., None] + 1e-10        # (B, N, 1)
    return jax.nn.relu((h + bias) / norm)


if __name__ == "__main__":
    # Small shapes consistent with the module's forward.
    B, N, L, D, H = 2, 8, 4, 32, 32

    key = jax.random.PRNGKey(0)
    k_graph, k_nodes, k_w, k_b = jax.random.split(key, 4)

    # Adjacency-per-label graph (0/1), as the module expects.
    graph = (jax.random.uniform(k_graph, (B, N, N, L)) < 0.3).astype(jnp.float32)
    nodes = jax.random.normal(k_nodes, (B, N, D), dtype=jnp.float32)

    # Deterministic xavier_normal_-style init (matching PyTorch fan computation).
    w_std = float(np.sqrt(2.0 / (D * H + L * H)))   # fan_in=D*H, fan_out=L*H for (L,D,H)
    b_std = float(np.sqrt(2.0 / (H + L)))           # fan_in=H,   fan_out=L   for (L,H)
    W = jax.random.normal(k_w, (L, D, H), dtype=jnp.float32) * w_std
    b = jax.random.normal(k_b, (L, H), dtype=jnp.float32) * b_std

    out = jax.block_until_ready(syntactic_gcn(graph, nodes, W, b))
    ref = jax.block_until_ready(_reference(graph, nodes, W, b))

    assert out.shape == (B, N, H)
    # bf16 hi/lo split of Z keeps ~1e-5 relative fidelity vs the f32 reference.
    np.testing.assert_allclose(np.asarray(out), np.asarray(ref), rtol=2e-4, atol=5e-5)

    print("KERNEL_OK")
</pallas_src>

<mosaic_0001>
module attributes {stable_mosaic.version = 11 : i64} {
  func.func @_syngcn_kernel(%arg0: i32, %arg1: i32, %arg2: memref<1x8x32xbf16, #tpu.memory_space<vmem>>, %arg3: memref<1x8x32xf32, #tpu.memory_space<vmem>>, %arg4: memref<32x512xf32, #tpu.memory_space<vmem>>, %arg5: memref<1x512xf32, #tpu.memory_space<vmem>>, %arg6: memref<1x8x128xf32, #tpu.memory_space<vmem>>, %arg7: memref<32x128xbf16, #tpu.memory_space<vmem>>, %arg8: memref<32x128xbf16, #tpu.memory_space<vmem>>) attributes {dimension_semantics = [#tpu.dimension_semantics<parallel>, #tpu.dimension_semantics<arbitrary>], iteration_bounds = array<i64: 2, 1>, scalar_prefetch = 0 : i64, scratch_operands = 2 : i64, tpu.core_type = #tpu.core_type<tc>, window_params = [{transform_indices = @transform_0, window_bounds = array<i64: 1, 8, 32>}, {transform_indices = @transform_1, window_bounds = array<i64: 1, 8, 32>}, {pipeline_mode = #tpu.pipeline_mode<synchronous>, transform_indices = @transform_2, window_bounds = array<i64: 32, 512>}, {pipeline_mode = #tpu.pipeline_mode<synchronous>, transform_indices = @transform_3, window_bounds = array<i64: 1, 512>}, {transform_indices = @transform_4, window_bounds = array<i64: 1, 8, 128>}]} {
    %c0_i32 = arith.constant 0 : i32
    %0 = arith.cmpi eq, %arg1, %c0_i32 : i32
    %1 = arith.extui %0 : i1 to i32
    %c0_i32_0 = arith.constant 0 : i32
    %2 = arith.cmpi ne, %1, %c0_i32_0 : i32
    scf.if %2 {
      %c0_13 = arith.constant 0 : index
      %c0_14 = arith.constant 0 : index
      %c0_15 = arith.constant 0 : index
      %21 = vector.load %arg3[%c0_13, %c0_14, %c0_15] : memref<1x8x32xf32, #tpu.memory_space<vmem>>, vector<1x8x32xf32>
      %22 = vector.shape_cast %21 : vector<1x8x32xf32> to vector<8x32xf32>
      %c0_16 = arith.constant 0 : index
      %c0_17 = arith.constant 0 : index
      %23 = vector.load %arg4[%c0_16, %c0_17] : memref<32x512xf32, #tpu.memory_space<vmem>>, vector<32x512xf32>
      %cst_18 = arith.constant dense<0.000000e+00> : vector<8x512xf32>
      %24 = tpu.matmul %22, %23, %cst_18 {dimension_numbers = #tpu.dot_dimension_numbers<[1], [0], [0], [1], [0, 0, 1, 1], [], []>} : vector<8x32xf32>, vector<32x512xf32>, vector<8x512xf32> -> vector<8x512xf32>
      %c0_19 = arith.constant 0 : index
      %c0_20 = arith.constant 0 : index
      %25 = vector.load %arg5[%c0_19, %c0_20] : memref<1x512xf32, #tpu.memory_space<vmem>>, vector<1x512xf32>
      %26 = vector.broadcast %25 : vector<1x512xf32> to vector<8x512xf32>
      %27 = arith.addf %24, %26 : vector<8x512xf32>
      %28 = vector.extract_strided_slice %27 {offsets = [0, 0], sizes = [8, 128], strides = [1, 1]} : vector<8x512xf32> to vector<8x128xf32>
      %29 = arith.truncf %28 : vector<8x128xf32> to vector<8x128xbf16>
      %c0_21 = arith.constant 0 : index
      %c0_22 = arith.constant 0 : index
      %30 = vector.load %arg7[%c0_21, %c0_22] : memref<32x128xbf16, #tpu.memory_space<vmem>>, vector<8x128xbf16>
      tpu.vector_store %arg7[%c0_21, %c0_22], %29 {strides = array<i32>} : memref<32x128xbf16, #tpu.memory_space<vmem>>, vector<8x128xbf16>,
      %31 = arith.extf %29 : vector<8x128xbf16> to vector<8x128xf32>
      %32 = arith.subf %28, %31 : vector<8x128xf32>
      %33 = arith.truncf %32 : vector<8x128xf32> to vector<8x128xbf16>
      %c0_23 = arith.constant 0 : index
      %c0_24 = arith.constant 0 : index
      %34 = vector.load %arg8[%c0_23, %c0_24] : memref<32x128xbf16, #tpu.memory_space<vmem>>, vector<8x128xbf16>
      tpu.vector_store %arg8[%c0_23, %c0_24], %33 {strides = array<i32>} : memref<32x128xbf16, #tpu.memory_space<vmem>>, vector<8x128xbf16>,
      %35 = vector.extract_strided_slice %27 {offsets = [0, 128], sizes = [8, 128], strides = [1, 1]} : vector<8x512xf32> to vector<8x128xf32>
      %36 = arith.truncf %35 : vector<8x128xf32> to vector<8x128xbf16>
      %c8 = arith.constant 8 : index
      %c0_25 = arith.constant 0 : index
      %37 = vector.load %arg7[%c8, %c0_25] : memref<32x128xbf16, #tpu.memory_space<vmem>>, vector<8x128xbf16>
      tpu.vector_store %arg7[%c8, %c0_25], %36 {strides = array<i32>} : memref<32x128xbf16, #tpu.memory_space<vmem>>, vector<8x128xbf16>,
      %38 = arith.extf %36 : vector<8x128xbf16> to vector<8x128xf32>
      %39 = arith.subf %35, %38 : vector<8x128xf32>
      %40 = arith.truncf %39 : vector<8x128xf32> to vector<8x128xbf16>
      %c8_26 = arith.constant 8 : index
      %c0_27 = arith.constant 0 : index
      %41 = vector.load %arg8[%c8_26, %c0_27] : memref<32x128xbf16, #tpu.memory_space<vmem>>, vector<8x128xbf16>
      tpu.vector_store %arg8[%c8_26, %c0_27], %40 {strides = array<i32>} : memref<32x128xbf16, #tpu.memory_space<vmem>>, vector<8x128xbf16>,
      %42 = vector.extract_strided_slice %27 {offsets = [0, 256], sizes = [8, 128], strides = [1, 1]} : vector<8x512xf32> to vector<8x128xf32>
      %43 = arith.truncf %42 : vector<8x128xf32> to vector<8x128xbf16>
      %c16 = arith.constant 16 : index
      %c0_28 = arith.constant 0 : index
      %44 = vector.load %arg7[%c16, %c0_28] : memref<32x128xbf16, #tpu.memory_space<vmem>>, vector<8x128xbf16>
      tpu.vector_store %arg7[%c16, %c0_28], %43 {strides = array<i32>} : memref<32x128xbf16, #tpu.memory_space<vmem>>, vector<8x128xbf16>,
      %45 = arith.extf %43 : vector<8x128xbf16> to vector<8x128xf32>
      %46 = arith.subf %42, %45 : vector<8x128xf32>
      %47 = arith.truncf %46 : vector<8x128xf32> to vector<8x128xbf16>
      %c16_29 = arith.constant 16 : index
      %c0_30 = arith.constant 0 : index
      %48 = vector.load %arg8[%c16_29, %c0_30] : memref<32x128xbf16, #tpu.memory_space<vmem>>, vector<8x128xbf16>
      tpu.vector_store %arg8[%c16_29, %c0_30], %47 {strides = array<i32>} : memref<32x128xbf16, #tpu.memory_space<vmem>>, vector<8x128xbf16>,
      %49 = vector.extract_strided_slice %27 {offsets = [0, 384], sizes = [8, 128], strides = [1, 1]} : vector<8x512xf32> to vector<8x128xf32>
      %50 = arith.truncf %49 : vector<8x128xf32> to vector<8x128xbf16>
      %c24 = arith.constant 24 : index
      %c0_31 = arith.constant 0 : index
      %51 = vector.load %arg7[%c24, %c0_31] : memref<32x128xbf16, #tpu.memory_space<vmem>>, vector<8x128xbf16>
      tpu.vector_store %arg7[%c24, %c0_31], %50 {strides = array<i32>} : memref<32x128xbf16, #tpu.memory_space<vmem>>, vector<8x128xbf16>,
      %52 = arith.extf %50 : vector<8x128xbf16> to vector<8x128xf32>
      %53 = arith.subf %49, %52 : vector<8x128xf32>
      %54 = arith.truncf %53 : vector<8x128xf32> to vector<8x128xbf16>
      %c24_32 = arith.constant 24 : index
      %c0_33 = arith.constant 0 : index
      %55 = vector.load %arg8[%c24_32, %c0_33] : memref<32x128xbf16, #tpu.memory_space<vmem>>, vector<8x128xbf16>
      tpu.vector_store %arg8[%c24_32, %c0_33], %54 {strides = array<i32>} : memref<32x128xbf16, #tpu.memory_space<vmem>>, vector<8x128xbf16>,
    } else {
    }
    %c0 = arith.constant 0 : index
    %c0_1 = arith.constant 0 : index
    %c0_2 = arith.constant 0 : index
    %3 = vector.load %arg2[%c0, %c0_1, %c0_2] : memref<1x8x32xbf16, #tpu.memory_space<vmem>>, vector<1x8x32xbf16>
    %4 = vector.shape_cast %3 : vector<1x8x32xbf16> to vector<8x32xbf16>
    %c0_3 = arith.constant 0 : index
    %c0_4 = arith.constant 0 : index
    %5 = vector.load %arg7[%c0_3, %c0_4] : memref<32x128xbf16, #tpu.memory_space<vmem>>, vector<32x128xbf16>
    %cst = arith.constant dense<0.000000e+00> : vector<8x128xf32>
    %6 = tpu.matmul %4, %5, %cst {dimension_numbers = #tpu.dot_dimension_numbers<[1], [0], [0], [1], [0, 0, 1, 1], [], []>} : vector<8x32xbf16>, vector<32x128xbf16>, vector<8x128xf32> -> vector<8x128xf32>
    %c0_5 = arith.constant 0 : index
    %c0_6 = arith.constant 0 : index
    %7 = vector.load %arg8[%c0_5, %c0_6] : memref<32x128xbf16, #tpu.memory_space<vmem>>, vector<32x128xbf16>
    %cst_7 = arith.constant dense<0.000000e+00> : vector<8x128xf32>
    %8 = tpu.matmul %4, %7, %cst_7 {dimension_numbers = #tpu.dot_dimension_numbers<[1], [0], [0], [1], [0, 0, 1, 1], [], []>} : vector<8x32xbf16>, vector<32x128xbf16>, vector<8x128xf32> -> vector<8x128xf32>
    %9 = arith.addf %6, %8 : vector<8x128xf32>
    %10 = vector.extract_strided_slice %9 {offsets = [0, 32], sizes = [8, 1], strides = [1, 1]} : vector<8x128xf32> to vector<8x1xf32>
    %cst_8 = arith.constant 1.000000e-10 : f32
    %11 = vector.broadcast %cst_8 : f32 to vector<8x1xf32>
    %12 = arith.addf %10, %11 : vector<8x1xf32>
    %13 = tpu.reciprocal %12 : vector<8x1xf32> -> vector<8x1xf32>
    %14 = vector.broadcast %13 : vector<8x1xf32> to vector<8x128xf32>
    %15 = arith.mulf %9, %14 : vector<8x128xf32>
    %cst_9 = arith.constant 0.000000e+00 : f32
    %16 = vector.broadcast %cst_9 : f32 to vector<8x128xf32>
    %17 = arith.maximumf %15, %16 : vector<8x128xf32>
    %c0_10 = arith.constant 0 : index
    %c0_11 = arith.constant 0 : index
    %c0_12 = arith.constant 0 : index
    %18 = vector.load %arg6[%c0_10, %c0_11, %c0_12] : memref<1x8x128xf32, #tpu.memory_space<vmem>>, vector<1x8x128xf32>
    %19 = vector.shape_cast %18 : vector<1x8x128xf32> to vector<8x128xf32>
    %20 = vector.shape_cast %17 : vector<8x128xf32> to vector<1x8x128xf32>
    tpu.vector_store %arg6[%c0_10, %c0_11, %c0_12], %20 {strides = array<i32>} : memref<1x8x128xf32, #tpu.memory_space<vmem>>, vector<1x8x128xf32>,
    return
  }
  func.func @transform_0(%arg0: i32, %arg1: i32) -> (i32, i32, i32) {
    %c0_i32 = arith.constant 0 : i32
    %c0_i32_0 = arith.constant 0 : i32
    return %arg0, %arg1, %c0_i32 : i32, i32, i32
  }
  func.func @transform_1(%arg0: i32, %arg1: i32) -> (i32, i32, i32) {
    %c0_i32 = arith.constant 0 : i32
    %c0_i32_0 = arith.constant 0 : i32
    %c0_i32_1 = arith.constant 0 : i32
    return %arg0, %c0_i32, %c0_i32_0 : i32, i32, i32
  }
  func.func @transform_2(%arg0: i32, %arg1: i32) -> (i32, i32) {
    %c0_i32 = arith.constant 0 : i32
    %c0_i32_0 = arith.constant 0 : i32
    %c0_i32_1 = arith.constant 0 : i32
    return %c0_i32, %c0_i32_0 : i32, i32
  }
  func.func @transform_3(%arg0: i32, %arg1: i32) -> (i32, i32) {
    %c0_i32 = arith.constant 0 : i32
    %c0_i32_0 = arith.constant 0 : i32
    %c0_i32_1 = arith.constant 0 : i32
    return %c0_i32, %c0_i32_0 : i32, i32
  }
  func.func @transform_4(%arg0: i32, %arg1: i32) -> (i32, i32, i32) {
    %c0_i32 = arith.constant 0 : i32
    %c0_i32_0 = arith.constant 0 : i32
    return %arg0, %arg1, %c0_i32 : i32, i32, i32
  }
}

</mosaic_0001>

<llo_original>
// kernel: tpu_custom_call.1
$region0: #{tpu_custom_call.1}
  #allocation0 [shape = 'u32[]', space=smem, size = 0x4, offset = 0x4, fixed_abs, tag = 'smem constant byte address 0x4 - core index']
  #allocation1 [shape = 'u32[144,128]{1,0:T(1,128)}', space=vmem, size = 0x12000, scoped, tag = 'internal scratch']
  #allocation2 [shape = 'bf16[32,128]{1,0:T(16,128)(2,1)}', space=vmem, size = 0x2000, scoped, tag = 'scratch operand']
  #allocation3 [shape = 'bf16[32,128]{1,0:T(16,128)(2,1)}', space=vmem, size = 0x2000, scoped, tag = 'scratch operand']
  %s0 = inlined_call_operand.hbm [shape: bf16[2,8,32], index: 0, kind: input, shape index: {}]
  %s1 = inlined_call_operand.hbm [shape: f32[2,8,32], index: 1, kind: input, shape index: {}]
  %s2 = inlined_call_operand.hbm [shape: f32[32,512], index: 2, kind: input, shape index: {}]
  %s3 = inlined_call_operand.vmem [shape: f32[1,512], index: 3, kind: input, shape index: {}]
  %s4 = inlined_call_operand.hbm [shape: f32[2,8,128], index: 4, kind: output, shape index: {}]
  %s5 = sld [smem:[#allocation0]]
  $region65: #{tpu_custom_call.1} parent=0
    _
  %s7 = ssub.s32 1, %s5
  %s8 = scalar_select 0, %s7, %s5
  $region1: #{tpu_custom_call.1} parent=0
    #allocation4 [shape = 'u8[4096]{0}', space=vmem, size = 0x1000, scoped, tag = 'input window, operand 0']
    #allocation5 [shape = 's32[2]{0}', space=sflag, size = 0x8, scoped, tag = 'scoped memory for tpu_custom_call.1']
    #allocation6 [shape = 's32[2]{0}', space=sflag, size = 0x8, scoped, tag = 'scoped memory for tpu_custom_call.1']
    #allocation7 [shape = 'u8[8192]{0}', space=vmem, size = 0x2000, scoped, tag = 'input window, operand 1']
    #allocation8 [shape = 's32[2]{0}', space=sflag, size = 0x8, scoped, tag = 'scoped memory for tpu_custom_call.1']
    #allocation9 [shape = 'u8[65536]{0}', space=vmem, size = 0x10000, scoped, tag = 'input window, operand 2, single buffered']
    #allocation10 [shape = 'u8[8192]{0}', space=vmem, size = 0x2000, scoped, tag = 'output window, operand 0']
    %9 = vsyncpa [#allocation5], 0
    %s10 = scalar_lea.sflag [#allocation5], 1
    %11 = vsyncpa %s10, 0
    %12 = vsyncpa [#allocation8], 0
    %s13 = scalar_lea.sflag [#allocation8], 1
    %14 = vsyncpa %s13, 0
    %15 = vsyncpa [#allocation6], 0
    %s16 = scalar_lea.sflag [#allocation6], 1
    %17 = vsyncpa %s16, 0
    loop: start=0, step=1, limit=4
    $region2: #{tpu_custom_call.1} parent=1 // loop_pre_header
      _
    $region3: #{tpu_custom_call.1} parent=1 // loop_header
      %s19 = sphi 0, %s23
      %p20 = scmp.ge.s32.totalorder %s19, 4
      %s26 = sphi 0, %s38
      %s27 = sphi 0, %s34
      %s28 = sphi 0, %s26
      %s29 = sphi 0, %s27
      %s30 = sphi 0, %s28
      %s31 = sphi 0, %s29
      %s43 = sphi 0, %s45
      %s46 = sphi 0, %s43
      %s47 = sphi 0, %s46
      %s63 = sphi 0, %s47
      %s69 = sphi 0, %s71
      %s72 = sphi 0, %s69
      %s73 = sphi 0, %s72
      %s89 = sphi 0, %s73
      %s93 = sphi 0, %s93
      %s95 = sphi 0, %s93
      %s96 = sphi 0, %s95
      %s110 = sphi 0, %s96
      %s114 = sphi 0, %s114
      %s116 = sphi 0, %s114
      %s117 = sphi 0, %s116
      %s131 = sphi 0, %s117
      %s139 = sphi 0, %s141
      %s142 = sphi 0, %s139
      %s143 = sphi 0, %s142
      %s159 = sphi 0, %s143
    $region4: #{tpu_custom_call.1} parent=1 // loop_header_branch
      %22 = sbr.rel (%p20) target = $region8
    $region5: #{tpu_custom_call.1} parent=1 // loop_body
      %s24 = ssub.s32 %s19, 1
      %s25 = ssub.s32 %s19, 2
      %s32 = sadd.s32 1, %s27
      %p33 = scmp.ge.s32.totalorder %s32, 1
      %s34 = scalar_select %p33, 0, %s32
      %s35 = sadd.s32 1, %s26
      %s36 = scalar_select %p33, %s35, %s26
      %p37 = scmp.ge.s32.totalorder %s36, 2
      %s38 = scalar_select %p37, 0, %s36
      %s39 = ssub.s32 %s26, %s38
      %s40 = ssub.s32 %s27, %s34
      %s41 = sor.u32 %s39, %s40
      %p42 = scmp.eq.s32.totalorder %s41, 0
      %s44 = sadd.s32 %s43, 1
      %s45 = scalar_select %p42, %s43, %s44
      %p48 = pneg %p42
      %p49 = scmp.eq.s32.totalorder %s19, 1
      %p50 = por %p48, %p49
      %p51 = scmp.ne.s32.totalorder %s43, %s46
      %p52 = scmp.eq.s32.totalorder %s19, 0
      %p53 = por %p51, %p52
      %p54 = scmp.ne.s32.totalorder %s43, %s46
      %p55 = scmp.eq.s32.totalorder %s24, 1
      %p56 = por %p54, %p55
      %p57 = scmp.ne.s32.totalorder %s46, %s47
      %p58 = scmp.eq.s32.totalorder %s24, 0
      %p59 = por %p57, %p58
      %p60 = scmp.ne.s32.totalorder %s46, %s47
      %p61 = scmp.eq.s32.totalorder %s25, 1
      %p62 = por %p60, %p61
      %p64 = scmp.ne.s32.totalorder %s47, %s63
      %p65 = scmp.eq.s32.totalorder %s25, 0
      %p66 = por %p64, %p65
      %s67 = ssub.s32 %s26, %s38
      %p68 = scmp.eq.s32.totalorder %s67, 0
      %s70 = sadd.s32 %s69, 1
      %s71 = scalar_select %p68, %s69, %s70
      %p74 = pneg %p68
      %p75 = scmp.eq.s32.totalorder %s19, 1
      %p76 = por %p74, %p75
      %p77 = scmp.ne.s32.totalorder %s69, %s72
      %p78 = scmp.eq.s32.totalorder %s19, 0
      %p79 = por %p77, %p78
      %p80 = scmp.ne.s32.totalorder %s69, %s72
      %p81 = scmp.eq.s32.totalorder %s24, 1
      %p82 = por %p80, %p81
      %p83 = scmp.ne.s32.totalorder %s72, %s73
      %p84 = scmp.eq.s32.totalorder %s24, 0
      %p85 = por %p83, %p84
      %p86 = scmp.ne.s32.totalorder %s72, %s73
      %p87 = scmp.eq.s32.totalorder %s25, 1
      %p88 = por %p86, %p87
      %p90 = scmp.ne.s32.totalorder %s73, %s89
      %p91 = scmp.eq.s32.totalorder %s25, 0
      %p92 = por %p90, %p91
      %s94 = sadd.s32 %s93, 1
      %p97 = scmp.eq.s32.totalorder %s19, 1
      %p98 = scmp.ne.s32.totalorder %s93, %s95
      %p99 = scmp.eq.s32.totalorder %s19, 0
      %p100 = por %p98, %p99
      %p101 = scmp.ne.s32.totalorder %s93, %s95
      %p102 = scmp.eq.s32.totalorder %s24, 1
      %p103 = por %p101, %p102
      %p104 = scmp.ne.s32.totalorder %s95, %s96
      %p105 = scmp.eq.s32.totalorder %s24, 0
      %p106 = por %p104, %p105
      %p107 = scmp.ne.s32.totalorder %s95, %s96
      %p108 = scmp.eq.s32.totalorder %s25, 1
      %p109 = por %p107, %p108
      %p111 = scmp.ne.s32.totalorder %s96, %s110
      %p112 = scmp.eq.s32.totalorder %s25, 0
      %p113 = por %p111, %p112
      %s115 = sadd.s32 %s114, 1
      %p118 = scmp.eq.s32.totalorder %s19, 1
      %p119 = scmp.ne.s32.totalorder %s114, %s116
      %p120 = scmp.eq.s32.totalorder %s19, 0
      %p121 = por %p119, %p120
      %p122 = scmp.ne.s32.totalorder %s114, %s116
      %p123 = scmp.eq.s32.totalorder %s24, 1
      %p124 = por %p122, %p123
      %p125 = scmp.ne.s32.totalorder %s116, %s117
      %p126 = scmp.eq.s32.totalorder %s24, 0
      %p127 = por %p125, %p126
      %p128 = scmp.ne.s32.totalorder %s116, %s117
      %p129 = scmp.eq.s32.totalorder %s25, 1
      %p130 = por %p128, %p129
      %p132 = scmp.ne.s32.totalorder %s117, %s131
      %p133 = scmp.eq.s32.totalorder %s25, 0
      %p134 = por %p132, %p133
      %s135 = ssub.s32 %s26, %s38
      %s136 = ssub.s32 %s27, %s34
      %s137 = sor.u32 %s135, %s136
      %p138 = scmp.eq.s32.totalorder %s137, 0
      %s140 = sadd.s32 %s139, 1
      %s141 = scalar_select %p138, %s139, %s140
      %p144 = pneg %p138
      %p145 = scmp.eq.s32.totalorder %s19, 1
      %p146 = por %p144, %p145
      %p147 = scmp.ne.s32.totalorder %s139, %s142
      %p148 = scmp.eq.s32.totalorder %s19, 0
      %p149 = por %p147, %p148
      %p150 = scmp.ne.s32.totalorder %s139, %s142
      %p151 = scmp.eq.s32.totalorder %s24, 1
      %p152 = por %p150, %p151
      %p153 = scmp.ne.s32.totalorder %s142, %s143
      %p154 = scmp.eq.s32.totalorder %s24, 0
      %p155 = por %p153, %p154
      %p156 = scmp.ne.s32.totalorder %s142, %s143
      %p157 = scmp.eq.s32.totalorder %s25, 1
      %p158 = por %p156, %p157
      %p160 = scmp.ne.s32.totalorder %s143, %s159
      %p161 = scmp.eq.s32.totalorder %s25, 0
      %p162 = por %p160, %p161
      %p163 = scmp.le.s32.totalorder 1, %s19
      %p164 = scmp.lt.s32.totalorder %s19, 3
      %p165 = pnand %p163, %p164
      %p166 = pneg %p165
      // Predicated region
      $region9: #{tpu_custom_call.1} parent=5 // pred_check
        _
      $region10: #{tpu_custom_call.1} parent=5 // pred_check_branch
        %168 = sbr.rel (%p165) target = $region12
      $region11: #{tpu_custom_call.1} parent=5 // pred_region
        %s169 = ssub.s32 %s19, 1
        // Predicated region
        $region13: #{tpu_custom_call.1} parent=11 // pred_check
          %p170 = pneg %p106
        $region14: #{tpu_custom_call.1} parent=11 // pred_check_branch
          %172 = sbr.rel (%p170) target = $region16
        $region15: #{tpu_custom_call.1} parent=11 // pred_region
          %s174 = ssub.s32 2048, 2048
          %175 = vsyncadd [#allocation8], %s174
          %s176 = sshll.u32 [#allocation9], 4
          %s177 = int_to_ptr.vmem [resolvable:$true] %s176
          %182 = dma.hbm_to_vmem [thread:$0]  %s2, 2048, %s177, [#allocation8], 512, 512, 32
        $region16: #{tpu_custom_call.1} parent=11 // pred_fallthru
          _
        // Predicated region
        $region17: #{tpu_custom_call.1} parent=11 // pred_check
          %p183 = pneg %p127
        $region18: #{tpu_custom_call.1} parent=11 // pred_check_branch
          %185 = sbr.rel (%p183) target = $region20
        $region19: #{tpu_custom_call.1} parent=11 // pred_region
          _
        $region20: #{tpu_custom_call.1} parent=11 // pred_fallthru
          _
      $region12: #{tpu_custom_call.1} parent=5 // pred_fallthru
        _
      %p186 = scmp.lt.s32.totalorder %s19, 2
      // Predicated region
      $region21: #{tpu_custom_call.1} parent=5 // pred_check
        %p187 = pneg %p186
      $region22: #{tpu_custom_call.1} parent=5 // pred_check_branch
        %189 = sbr.rel (%p187) target = $region24
      $region23: #{tpu_custom_call.1} parent=5 // pred_region
        // Predicated region
        $region25: #{tpu_custom_call.1} parent=23 // pred_check
          %p190 = pneg %p53
        $region26: #{tpu_custom_call.1} parent=23 // pred_check_branch
          %192 = sbr.rel (%p190) target = $region28
        $region27: #{tpu_custom_call.1} parent=23 // pred_region
          %s193 = sand.u32 %s43, 1
          %s194 = scalar_lea.sflag [#allocation5], %s193
          %s195 = sand.u32 %s43, 1
          %s196 = smul.addr %s195, 4
          %s197 = scalar_lea.vmem [#allocation4], %s196
          %s199 = ssub.s32 64, 64
          %200 = vsyncadd %s194, %s199
          %s201 = sadd.s32 %s27, %s26
          %s202 = smul.addr %s201, 64
          %s203 = scalar_lea.hbm %s0, %s202
          %s205 = sshll.u32 %s197, 4
          %s206 = int_to_ptr.vmem [resolvable:$true] %s205
          %208 = dma.hbm_to_vmem [thread:$0]  %s203, 64, %s206, %s194
        $region28: #{tpu_custom_call.1} parent=23 // pred_fallthru
          _
        // Predicated region
        $region29: #{tpu_custom_call.1} parent=23 // pred_check
          %p209 = pneg %p79
        $region30: #{tpu_custom_call.1} parent=23 // pred_check_branch
          %211 = sbr.rel (%p209) target = $region32
        $region31: #{tpu_custom_call.1} parent=23 // pred_region
          %s212 = sand.u32 %s19, 1
          %s213 = scalar_lea.sflag [#allocation8], %s212
          %s214 = sand.u32 %s69, 1
          %s215 = smul.addr %s214, 8
          %s216 = scalar_lea.vmem [#allocation7], %s215
          %s218 = ssub.s32 128, 128
          %219 = vsyncadd %s213, %s218
          %s220 = smul.addr %s26, 128
          %s221 = scalar_lea.hbm %s1, %s220
          %s223 = sshll.u32 %s216, 4
          %s224 = int_to_ptr.vmem [resolvable:$true] %s223
          %226 = dma.hbm_to_vmem [thread:$0]  %s221, 128, %s224, %s213
        $region32: #{tpu_custom_call.1} parent=23 // pred_fallthru
          _
      $region24: #{tpu_custom_call.1} parent=5 // pred_fallthru
        _
      %p227 = scmp.le.s32.totalorder 1, %s19
      %p228 = scmp.lt.s32.totalorder %s19, 3
      %p229 = pnand %p227, %p228
      %p230 = pneg %p229
      // Predicated region
      $region33: #{tpu_custom_call.1} parent=5 // pred_check
        _
      $region34: #{tpu_custom_call.1} parent=5 // pred_check_branch
        %232 = sbr.rel (%p229) target = $region36
      $region35: #{tpu_custom_call.1} parent=5 // pred_region
        %s233 = ssub.s32 %s19, 1
        %s234 = sand.u32 %s46, 1
        %s235 = scalar_lea.sflag [#allocation5], %s234
        %s236 = sand.u32 %s46, 1
        %s237 = smul.addr %s236, 4
        %s238 = scalar_lea.vmem [#allocation4], %s237
        // Predicated region
        $region37: #{tpu_custom_call.1} parent=35 // pred_check
          %p239 = pneg %p59
        $region38: #{tpu_custom_call.1} parent=35 // pred_check_branch
          %241 = sbr.rel (%p239) target = $region40
        $region39: #{tpu_custom_call.1} parent=35 // pred_region
          %242 = dma.done %s235, 64
        $region40: #{tpu_custom_call.1} parent=35 // pred_fallthru
          _
        %s243 = sand.u32 %s24, 1
        %s244 = scalar_lea.sflag [#allocation8], %s243
        %s245 = sand.u32 %s72, 1
        %s246 = smul.addr %s245, 8
        %s247 = scalar_lea.vmem [#allocation7], %s246
        // Predicated region
        $region41: #{tpu_custom_call.1} parent=35 // pred_check
          %p248 = pneg %p85
        $region42: #{tpu_custom_call.1} parent=35 // pred_check_branch
          %250 = sbr.rel (%p248) target = $region44
        $region43: #{tpu_custom_call.1} parent=35 // pred_region
          %251 = dma.done %s244, 128
        $region44: #{tpu_custom_call.1} parent=35 // pred_fallthru
          _
        // Predicated region
        $region45: #{tpu_custom_call.1} parent=35 // pred_check
          %p252 = pneg %p106
        $region46: #{tpu_custom_call.1} parent=35 // pred_check_branch
          %254 = sbr.rel (%p252) target = $region48
        $region47: #{tpu_custom_call.1} parent=35 // pred_region
          %255 = dma.done [#allocation8], 2048
        $region48: #{tpu_custom_call.1} parent=35 // pred_fallthru
          _
        %s256 = sand.u32 %s46, 1
        %s257 = scalar_lea.sflag [#allocation5], %s256
        %s258 = sand.u32 %s46, 1
        %s259 = smul.addr %s258, 4
        %s260 = scalar_lea.vmem [#allocation4], %s259
        %p261 = pneg %p59
        %p262 = pneg %p56
        %s263 = sand.u32 %s24, 1
        %s264 = scalar_lea.sflag [#allocation8], %s263
        %s265 = sand.u32 %s72, 1
        %s266 = smul.addr %s265, 8
        %s267 = scalar_lea.vmem [#allocation7], %s266
        %p268 = pneg %p85
        %p269 = pneg %p82
        %p270 = pneg %p106
        %p271 = pneg %p103
        %p272 = pneg %p127
        %p273 = pneg %p124
        %p274 = pneg %p155
        %p275 = pneg %p152
        %s276 = sand.u32 %s142, 1
        %s277 = scalar_lea.sflag [#allocation6], %s276
        %s278 = sand.u32 %s142, 1
        %s279 = smul.addr %s278, 8
        %s280 = scalar_lea.vmem [#allocation10], %s279
        %p282 = scmp.eq.s32.totalorder %s29, 0
        // Predicated region
        $region49: #{tpu_custom_call.1} parent=35 // pred_check
          %p283 = pneg %p282
        $region50: #{tpu_custom_call.1} parent=35 // pred_check_branch
          %285 = sbr.rel (%p283) target = $region52
        $region51: #{tpu_custom_call.1} parent=35 // pred_region
          %v286 = vld [vmem:[%s247] sm:$0xff]
          %v287 = vld [vmem:[#allocation9] sm:$0xff]
          %v288 = vld [vmem:[#allocation9 + $0x8] sm:$0xff]
          %v289 = vld [vmem:[#allocation9 + $0x10] sm:$0xff]
          %v290 = vld [vmem:[#allocation9 + $0x18] sm:$0xff]
          %v291 = vld [vmem:[#allocation9 + $0x20] sm:$0xff]
          %v292 = vld [vmem:[#allocation9 + $0x28] sm:$0xff]
          %v293 = vld [vmem:[#allocation9 + $0x30] sm:$0xff]
          %v294 = vld [vmem:[#allocation9 + $0x38] sm:$0xff]
          %v295 = vld [vmem:[#allocation9 + $0x40] sm:$0xff]
          %v296 = vld [vmem:[#allocation9 + $0x48] sm:$0xff]
          %v297 = vld [vmem:[#allocation9 + $0x50] sm:$0xff]
          %v298 = vld [vmem:[#allocation9 + $0x58] sm:$0xff]
          %v299 = vld [vmem:[#allocation9 + $0x60] sm:$0xff]
          %v300 = vld [vmem:[#allocation9 + $0x68] sm:$0xff]
          %v301 = vld [vmem:[#allocation9 + $0x70] sm:$0xff]
          %v302 = vld [vmem:[#allocation9 + $0x78] sm:$0xff]
          %v303 = vld [vmem:[%s3] sm:$0xf]
          %v305 = vlaneseq
          %v306 = vshrl.u32 %v305, 7
          %v307 = vsub.s32 0, %v306
          %v308 = vrot.slane %v303, %v307
          %v309 = vlaneseq
          %v310 = vshrl.u32 %v309, 7
          %v311 = vsub.s32 1, %v310
          %v312 = vrot.slane %v303, %v311
          %v313 = vlaneseq
          %v314 = vshrl.u32 %v313, 7
          %v315 = vsub.s32 2, %v314
          %v316 = vrot.slane %v303, %v315
          %v317 = vlaneseq
          %v318 = vshrl.u32 %v317, 7
          %v319 = vsub.s32 3, %v318
          %v320 = vrot.slane %v303, %v319
          %vm325 = vcmask 261120
          %v327 = vsel %vm325, %v286, 0
          %329 = vmatprep.subr.mxu0 %v288
          %330 = vmatpush1.msra.mxu0 %v287
          %331 = vmatprep.subr.mxu0 %v292
          %332 = vmatpush1.msra.mxu0 %v291
          %333 = vmatprep.subr.mxu0 %v296
          %334 = vmatpush1.msra.mxu0 %v295
          %335 = vmatprep.subr.mxu0 %v300
          %336 = vmatpush1.msra.mxu0 %v299
          %337 = vmatprep.subr.mxu0 0.0
          %338 = vmatpush1.msra.mxu0 0.0
          %339 = vmatprep.subr.mxu0 0.0
          %340 = vmatpush1.msra.mxu0 0.0
          %341 = vmatprep.subr.mxu0 0.0
          %342 = vmatpush1.msra.mxu0 0.0
          %343 = vmatprep.subr.mxu0 0.0
          %344 = vmatpush1.msra.mxu0 0.0
          %345 = vmatprep.subr.mxu0 0.0
          %346 = vmatpush1.msra.mxu0 0.0
          %347 = vmatprep.subr.mxu0 0.0
          %348 = vmatpush1.msra.mxu0 0.0
          %349 = vmatprep.subr.mxu0 0.0
          %350 = vmatpush1.msra.mxu0 0.0
          %351 = vmatprep.subr.mxu0 0.0
          %352 = vmatpush1.msra.mxu0 0.0
          %353 = vmatprep.subr.mxu0 0.0
          %354 = vmatpush1.msra.mxu0 0.0
          %355 = vmatprep.subr.mxu0 0.0
          %356 = vmatpush1.msra.mxu0 0.0
          %357 = vmatprep.subr.mxu0 0.0
          %358 = vmatpush1.msra.mxu0 0.0
          %359 = vmatprep.subr.mxu0 0.0
          %360 = vmatpush1.msra.mxu0 0.0
          %361 = vmatprep.subr.mxu0 0.0
          %362 = vmatpush1.msra.mxu0 0.0
          %363 = vmatprep.subr.mxu0 0.0
          %364 = vmatpush1.msra.mxu0 0.0
          %365 = vmatprep.subr.mxu0 0.0
          %366 = vmatpush1.msra.mxu0 0.0
          %367 = vmatprep.subr.mxu0 0.0
          %368 = vmatpush1.msra.mxu0 0.0
          %369 = vmatprep.subr.mxu0 0.0
          %370 = vmatpush1.msra.mxu0 0.0
          %371 = vmatprep.subr.mxu0 0.0
          %372 = vmatpush1.msra.mxu0 0.0
          %373 = vmatprep.subr.mxu0 0.0
          %374 = vmatpush1.msra.mxu0 0.0
          %375 = vmatprep.subr.mxu0 0.0
          %376 = vmatpush1.msra.mxu0 0.0
          %377 = vmatprep.subr.mxu0 0.0
          %378 = vmatpush1.msra.mxu0 0.0
          %379 = vmatprep.subr.mxu0 0.0
          %380 = vmatpush1.msra.mxu0 0.0
          %381 = vmatprep.subr.mxu0 0.0
          %382 = vmatpush1.msra.mxu0 0.0
          %383 = vmatprep.subr.mxu0 0.0
          %384 = vmatpush1.msra.mxu0 0.0
          %385 = vmatprep.subr.mxu0 0.0
          %386 = vmatpush1.msra.mxu0 0.0
          %387 = vmatprep.subr.mxu0 0.0
          %388 = vmatpush1.msra.mxu0 0.0
          %389 = vmatprep.subr.mxu0 0.0
          %390 = vmatpush1.msra.mxu0 0.0
          %391 = vmatprep.subr.mxu0 0.0
          %392 = vmatpush1.msra.mxu0 0.0
          %393 = vmatprep.mubr.f32.mxu0 0.0
          %394 = vmatmul.mubr.f32.gmra.mrb[0].mxu0 %v327
          %v395 = vpop.f32.mrb[0].mxu0
          %v396 = vadd.f32 %v308, %v395
          %v397 = vpop.f32.mrb[0].mxu0
          %v398 = vadd.f32 %v312, %v397
          %399 = vdwg.mxu0
          %400 = vmatprep.subr.mxu0 %v290
          %401 = vmatpush1.msra.mxu0 %v289
          %402 = vmatprep.subr.mxu0 %v294
          %403 = vmatpush1.msra.mxu0 %v293
          %404 = vmatprep.subr.mxu0 %v298
          %405 = vmatpush1.msra.mxu0 %v297
          %406 = vmatprep.subr.mxu0 %v302
          %407 = vmatpush1.msra.mxu0 %v301
          %408 = vmatprep.subr.mxu0 0.0
          %409 = vmatpush1.msra.mxu0 0.0
          %410 = vmatprep.subr.mxu0 0.0
          %411 = vmatpush1.msra.mxu0 0.0
          %412 = vmatprep.subr.mxu0 0.0
          %413 = vmatpush1.msra.mxu0 0.0
          %414 = vmatprep.subr.mxu0 0.0
          %415 = vmatpush1.msra.mxu0 0.0
          %416 = vmatprep.subr.mxu0 0.0
          %417 = vmatpush1.msra.mxu0 0.0
          %418 = vmatprep.subr.mxu0 0.0
          %419 = vmatpush1.msra.mxu0 0.0
          %420 = vmatprep.subr.mxu0 0.0
          %421 = vmatpush1.msra.mxu0 0.0
          %422 = vmatprep.subr.mxu0 0.0
          %423 = vmatpush1.msra.mxu0 0.0
          %424 = vmatprep.subr.mxu0 0.0
          %425 = vmatpush1.msra.mxu0 0.0
          %426 = vmatprep.subr.mxu0 0.0
          %427 = vmatpush1.msra.mxu0 0.0
          %428 = vmatprep.subr.mxu0 0.0
          %429 = vmatpush1.msra.mxu0 0.0
          %430 = vmatprep.subr.mxu0 0.0
          %431 = vmatpush1.msra.mxu0 0.0
          %432 = vmatprep.subr.mxu0 0.0
          %433 = vmatpush1.msra.mxu0 0.0
          %434 = vmatprep.subr.mxu0 0.0
          %435 = vmatpush1.msra.mxu0 0.0
          %436 = vmatprep.subr.mxu0 0.0
          %437 = vmatpush1.msra.mxu0 0.0
          %438 = vmatprep.subr.mxu0 0.0
          %439 = vmatpush1.msra.mxu0 0.0
          %440 = vmatprep.subr.mxu0 0.0
          %441 = vmatpush1.msra.mxu0 0.0
          %442 = vmatprep.subr.mxu0 0.0
          %443 = vmatpush1.msra.mxu0 0.0
          %444 = vmatprep.subr.mxu0 0.0
          %445 = vmatpush1.msra.mxu0 0.0
          %446 = vmatprep.subr.mxu0 0.0
          %447 = vmatpush1.msra.mxu0 0.0
          %448 = vmatprep.subr.mxu0 0.0
          %449 = vmatpush1.msra.mxu0 0.0
          %450 = vmatprep.subr.mxu0 0.0
          %451 = vmatpush1.msra.mxu0 0.0
          %452 = vmatprep.subr.mxu0 0.0
          %453 = vmatpush1.msra.mxu0 0.0
          %454 = vmatprep.subr.mxu0 0.0
          %455 = vmatpush1.msra.mxu0 0.0
          %456 = vmatprep.subr.mxu0 0.0
          %457 = vmatpush1.msra.mxu0 0.0
          %458 = vmatprep.subr.mxu0 0.0
          %459 = vmatpush1.msra.mxu0 0.0
          %460 = vmatprep.subr.mxu0 0.0
          %461 = vmatpush1.msra.mxu0 0.0
          %462 = vmatprep.subr.mxu0 0.0
          %463 = vmatpush1.msra.mxu0 0.0
          %464 = vmatprep.mubr.f32.mxu0 0.0
          %465 = vmatmul.mubr.f32.gmra.mrb[0].mxu0 %v327
          %v466 = vpop.f32.mrb[0].mxu0
          %v467 = vadd.f32 %v316, %v466
          %v468 = vpop.f32.mrb[0].mxu0
          %v469 = vadd.f32 %v320, %v468
          %470 = vdwg.mxu0
          %v471 = vpack.c.bf16 %v396, %v396
          %472 = vst [vmem:[#allocation2] sm:$0xf] %v471
          %v473 = vunpack.c.l.bf16 %v471
          %v474 = vsub.f32 %v396, %v473
          %v475 = vpack.c.bf16 %v474, %v474
          %476 = vst [vmem:[#allocation3] sm:$0xf] %v475
          %v477 = vpack.c.bf16 %v398, %v398
          %v479 = vrot.slane %v477, 4
          %481 = vst [vmem:[#allocation2] sm:$0xf0] %v479
          %v482 = vunpack.c.l.bf16 %v477
          %v483 = vsub.f32 %v398, %v482
          %v484 = vpack.c.bf16 %v483, %v483
          %v486 = vrot.slane %v484, 4
          %488 = vst [vmem:[#allocation3] sm:$0xf0] %v486
          %v489 = vpack.c.bf16 %v467, %v467
          %490 = vst [vmem:[#allocation2 + $0x8] sm:$0xf] %v489
          %v491 = vunpack.c.l.bf16 %v489
          %v492 = vsub.f32 %v467, %v491
          %v493 = vpack.c.bf16 %v492, %v492
          %494 = vst [vmem:[#allocation3 + $0x8] sm:$0xf] %v493
          %v495 = vpack.c.bf16 %v469, %v469
          %v497 = vrot.slane %v495, 4
          %499 = vst [vmem:[#allocation2 + $0x8] sm:$0xf0] %v497
          %v500 = vunpack.c.l.bf16 %v495
          %v501 = vsub.f32 %v469, %v500
          %v502 = vpack.c.bf16 %v501, %v501
          %v504 = vrot.slane %v502, 4
          %506 = vst [vmem:[#allocation3 + $0x8] sm:$0xf0] %v504
        $region52: #{tpu_custom_call.1} parent=35 // pred_fallthru
          _
        %v507 = vld [vmem:[%s238] sm:$0xf]
        %v508 = vld [vmem:[#allocation2] sm:$0xff]
        %v509 = vld [vmem:[#allocation2 + $0x8] sm:$0xff]
        %v510 = vld [vmem:[#allocation3] sm:$0xff]
        %v511 = vld [vmem:[#allocation3 + $0x8] sm:$0xff]
        %vm512 = vcmask 261120
        %v514 = vsel %vm512, %v507, 0
        %516 = vmatprep.subr.bf16.mxu0 0
        %517 = vmatpush1.bf16.msra.mxu0 %v510
        %518 = vmatprep.subr.bf16.mxu0 0
        %519 = vmatpush1.bf16.msra.mxu0 %v511
        %520 = vmatprep.subr.bf16.mxu0 0
        %521 = vmatpush1.bf16.msra.mxu0 0
        %522 = vmatprep.subr.bf16.mxu0 0
        %523 = vmatpush1.bf16.msra.mxu0 0
        %524 = vmatprep.subr.bf16.mxu0 0
        %525 = vmatpush1.bf16.msra.mxu0 0
        %526 = vmatprep.subr.bf16.mxu0 0
        %527 = vmatpush1.bf16.msra.mxu0 0
        %528 = vmatprep.subr.bf16.mxu0 0
        %529 = vmatpush1.bf16.msra.mxu0 0
        %530 = vmatprep.subr.bf16.mxu0 0
        %531 = vmatpush1.bf16.msra.mxu0 0
        %532 = vmatprep.subr.bf16.mxu0 0
        %533 = vmatpush1.bf16.msra.mxu0 0
        %534 = vmatprep.subr.bf16.mxu0 0
        %535 = vmatpush1.bf16.msra.mxu0 0
        %536 = vmatprep.subr.bf16.mxu0 0
        %537 = vmatpush1.bf16.msra.mxu0 0
        %538 = vmatprep.subr.bf16.mxu0 0
        %539 = vmatpush1.bf16.msra.mxu0 0
        %540 = vmatprep.subr.bf16.mxu0 0
        %541 = vmatpush1.bf16.msra.mxu0 0
        %542 = vmatprep.subr.bf16.mxu0 0
        %543 = vmatpush1.bf16.msra.mxu0 0
        %544 = vmatprep.subr.bf16.mxu0 0
        %545 = vmatpush1.bf16.msra.mxu0 0
        %546 = vmatprep.subr.bf16.mxu0 0
        %547 = vmatpush1.bf16.msra.mxu0 0
        %548 = vmatprep.mubr.bf16.mxu0 0
        %549 = vmatmul.mubr.bf16.gmra.mrb[0].mxu0 %v514
        %v550 = vpop.f32.mrb[0].mxu0
        %v551 = vadd.f32 0.0, %v550
        %v552 = vpop.f32.mrb[0].mxu0
        %v553 = vpop.f32.mrb[0].mxu0
        %v554 = vpop.f32.mrb[0].mxu0
        %555 = vdwg.mxu0
        %556 = vmatprep.subr.bf16.mxu0 0
        %557 = vmatpush1.bf16.msra.mxu0 %v508
        %558 = vmatprep.subr.bf16.mxu0 0
        %559 = vmatpush1.bf16.msra.mxu0 %v509
        %560 = vmatprep.subr.bf16.mxu0 0
        %561 = vmatpush1.bf16.msra.mxu0 0
        %562 = vmatprep.subr.bf16.mxu0 0
        %563 = vmatpush1.bf16.msra.mxu0 0
        %564 = vmatprep.subr.bf16.mxu0 0
        %565 = vmatpush1.bf16.msra.mxu0 0
        %566 = vmatprep.subr.bf16.mxu0 0
        %567 = vmatpush1.bf16.msra.mxu0 0
        %568 = vmatprep.subr.bf16.mxu0 0
        %569 = vmatpush1.bf16.msra.mxu0 0
        %570 = vmatprep.subr.bf16.mxu0 0
        %571 = vmatpush1.bf16.msra.mxu0 0
        %572 = vmatprep.subr.bf16.mxu0 0
        %573 = vmatpush1.bf16.msra.mxu0 0
        %574 = vmatprep.subr.bf16.mxu0 0
        %575 = vmatpush1.bf16.msra.mxu0 0
        %576 = vmatprep.subr.bf16.mxu0 0
        %577 = vmatpush1.bf16.msra.mxu0 0
        %578 = vmatprep.subr.bf16.mxu0 0
        %579 = vmatpush1.bf16.msra.mxu0 0
        %580 = vmatprep.subr.bf16.mxu0 0
        %581 = vmatpush1.bf16.msra.mxu0 0
        %582 = vmatprep.subr.bf16.mxu0 0
        %583 = vmatpush1.bf16.msra.mxu0 0
        %584 = vmatprep.subr.bf16.mxu0 0
        %585 = vmatpush1.bf16.msra.mxu0 0
        %586 = vmatprep.subr.bf16.mxu0 0
        %587 = vmatpush1.bf16.msra.mxu0 0
        %588 = vmatprep.mubr.bf16.mxu0 0
        %589 = vmatmul.mubr.bf16.gmra.mrb[0].mxu0 %v514
        %v590 = vpop.f32.mrb[0].mxu0
        %v591 = vadd.f32 %v551, %v590
        %v592 = vpop.f32.mrb[0].mxu0
        %v593 = vpop.f32.mrb[0].mxu0
        %v594 = vpop.f32.mrb[0].mxu0
        %595 = vdwg.mxu0
        %v596 = vadd.f32 %v591, 1e-10
        %v597 = vrcp.pop %v596
        %599 = vset.pattern.permute.xlu0 32
        %600 = vperm.xlu0 %599, %v597
        %v601 = vpop.permute.xlu0 %600
        %v603 = vmul.f32 %v591, %v601
        %v604 = vmax.f32 %v603, 0.0
        %605 = vst [vmem:[%s280] sm:$0xff] %v604
        %s606 = sand.u32 %s142, 1
        %s607 = scalar_lea.sflag [#allocation6], %s606
        %s608 = sand.u32 %s142, 1
        %s609 = smul.addr %s608, 8
        %s610 = scalar_lea.vmem [#allocation10], %s609
        // Predicated region
        $region53: #{tpu_custom_call.1} parent=35 // pred_check
          %p611 = pneg %p152
        $region54: #{tpu_custom_call.1} parent=35 // pred_check_branch
          %613 = sbr.rel (%p611) target = $region56
        $region55: #{tpu_custom_call.1} parent=35 // pred_region
          %s615 = ssub.s32 128, 128
          %616 = vsyncadd %s607, %s615
          %s617 = sadd.s32 %s29, %s28
          %s618 = smul.addr %s617, 128
          %s619 = scalar_lea.hbm %s4, %s618
          %s621 = sshll.u32 %s610, 4
          %s622 = int_to_ptr.vmem [resolvable:$true] %s621
          %624 = dma.vmem_to_hbm [thread:$0]  %s622, 128, %s619, %s607
        $region56: #{tpu_custom_call.1} parent=35 // pred_fallthru
          _
      $region36: #{tpu_custom_call.1} parent=5 // pred_fallthru
        _
      %p625 = scmp.le.s32.totalorder 2, %s19
      // Predicated region
      $region57: #{tpu_custom_call.1} parent=5 // pred_check
        %p626 = pneg %p625
      $region58: #{tpu_custom_call.1} parent=5 // pred_check_branch
        %628 = sbr.rel (%p626) target = $region60
      $region59: #{tpu_custom_call.1} parent=5 // pred_region
        %s629 = ssub.s32 %s19, 2
        // Predicated region
        $region61: #{tpu_custom_call.1} parent=59 // pred_check
          %p630 = pneg %p158
        $region62: #{tpu_custom_call.1} parent=59 // pred_check_branch
          %632 = sbr.rel (%p630) target = $region64
        $region63: #{tpu_custom_call.1} parent=59 // pred_region
          %s633 = sand.u32 %s143, 1
          %s634 = scalar_lea.sflag [#allocation6], %s633
          %s635 = sand.u32 %s143, 1
          %s636 = smul.addr %s635, 8
          %s637 = scalar_lea.vmem [#allocation10], %s636
          %638 = dma.done %s634, 128
        $region64: #{tpu_custom_call.1} parent=59 // pred_fallthru
          _
      $region60: #{tpu_custom_call.1} parent=5 // pred_fallthru
        _
    $region6: #{tpu_custom_call.1} parent=1 // loop_footer
      %s23 = sadd.s32 1, %s19
    $region7: #{tpu_custom_call.1} parent=1 // loop_footer_branch
      %18 = sbr.rel target = $region3
    $region8: #{tpu_custom_call.1} parent=1 // loop_exit
      _
    %639 = vsyncpa [#allocation5], 1
    %s640 = scalar_lea.sflag [#allocation5], 1
    %641 = vsyncpa %s640, 1
    %642 = vsyncpa [#allocation8], 1
    %s643 = scalar_lea.sflag [#allocation8], 1
    %644 = vsyncpa %s643, 1
    %645 = vsyncpa [#allocation6], 1
    %s646 = scalar_lea.sflag [#allocation6], 1
    %647 = vsyncpa %s646, 1

</llo_original>
